<compile_context>
chip_gen: v5e
topology: v5e:2x2
jax: 0.10.0
libtpu: 0.0.40
codegen_flags: <defaults>
</compile_context>

<pallas_src>
import functools

import jax
import jax.numpy as jnp
from jax.experimental import pallas as pl
from jax.experimental.pallas import tpu as pltpu

_MIB = 1024 * 1024


def _cdiv(a, b):
    return -(-a // b)


def _round_up(a, b):
    return _cdiv(a, b) * b


def _vmem_plan():
    """Per-generation (tile-footprint budget, scoped-VMEM limit, #input bufs)."""
    try:
        info = pltpu.get_tpu_info()
        phys = int(getattr(info, "vmem_capacity_bytes", 64 * _MIB))
    except Exception:  # off-TPU / unknown: conservative (v7x-sized) fallback
        phys = 64 * _MIB
    if phys >= 128 * _MIB:
        # v5e / v6e: VMEM is plentiful -> big tiles + a 3rd input buffer to
        # hide DMA jitter; 96 MiB scoped limit leaves ample headroom.
        return 64 * _MIB, 96 * _MIB, 3
    if phys >= 64 * _MIB:
        # v7x: ~40 MiB of tiles, 52 MiB scoped limit leaves ~12 MiB for the
        # weight buffer + f32 intermediates Mosaic materializes.
        return 40 * _MIB, 52 * _MIB, 2
    return 24 * _MIB, min(phys - 8 * _MIB, 48 * _MIB), 2


def _choose_row_tile(rows, dim, in_itemsize, out_itemsize, in_buffers,
                     vmem_budget_bytes, target_rows):
    """Pick the per-step row tile for the 1-D row grid."""
    # Sub-32-bit dtypes pack 2 rows per sublane -> prefer second-minor tiles
    # that are multiples of 16 for them (8 for 32-bit dtypes).
    align = 16 if min(in_itemsize, out_itemsize) == 2 else 8

    # Tile footprint: `in_buffers` input buffers + double-buffered output +
    # ~2 f32 temp tiles of headroom for in-register intermediates.
    per_row_bytes = dim * (in_buffers * in_itemsize + 2 * out_itemsize + 8)
    tile = max(align, min(target_rows, vmem_budget_bytes // per_row_bytes))
    tile = (tile // align) * align

    if tile >= rows:
        # Single full-array block (block_shape == array shape is always legal,
        # even when `rows` is not a multiple of the sublane alignment).
        return rows

    # Megacore balance: prefer an even number of grid steps so the two
    # TensorCores (v7x) get equal work; costs at most one extra step.
    steps = _cdiv(rows, tile)
    if steps > 1 and steps % 2 == 1:
        t2 = _round_up(_cdiv(rows, steps + 1), align)
        if t2 >= align and _cdiv(rows, t2) % 2 == 0:
            tile = t2
    return tile


def _t5_layernorm_kernel(x_ref, w_ref, o_ref, *, eps, cast_to_weight_dtype,
                         weight_dtype):
    # x_ref: (row_tile, dim), w_ref: (1, dim), o_ref: (row_tile, dim)
    x = x_ref[...]
    # Widen to f32 in-register only; HBM traffic stays in the input dtype.
    x_f32 = x.astype(jnp.float32)
    # mean(x^2) over the last axis in f32 (matches x.float().pow(2).mean(-1)).
    mean_sq = jnp.mean(x_f32 * x_f32, axis=-1, keepdims=True)
    inv_rms = jax.lax.rsqrt(mean_sq + eps)          # f32, EUP rsqrt (free slot)
    y = x_f32 * inv_rms
    if cast_to_weight_dtype:
        # torch: if weight is fp16/bf16, x = x.type_as(weight) before scaling
        y = y.astype(weight_dtype)
    o_ref[...] = (w_ref[...] * y).astype(o_ref.dtype)


def t5_layer_norm(x, weight, eps=1e-6, target_row_tile=8192):
    """T5LayerNorm forward. x: [..., dim], weight: [dim]."""
    dim = x.shape[-1]
    assert weight.shape == (dim,)
    orig_shape = x.shape
    x2d = x.reshape(-1, dim)
    rows = x2d.shape[0]

    cast = weight.dtype in (jnp.float16, jnp.bfloat16)
    # Output dtype follows torch type promotion of weight * x.
    out_dtype = weight.dtype if cast else jnp.result_type(weight.dtype,
                                                          jnp.float32)
    out_itemsize = jnp.dtype(out_dtype).itemsize

    budget, vmem_limit, in_buffers = _vmem_plan()
    row_tile = _choose_row_tile(rows, dim, x.dtype.itemsize, out_itemsize,
                                in_buffers, budget, target_row_tile)

    kernel = functools.partial(
        _t5_layernorm_kernel,
        eps=eps,
        cast_to_weight_dtype=cast,
        weight_dtype=weight.dtype,
    )

    w2d = weight.reshape(1, dim)
    grid = (_cdiv(rows, row_tile),)

    x_spec_kwargs = {}
    if in_buffers != 2:
        x_spec_kwargs["pipeline_mode"] = pl.Buffered(in_buffers)

    cost = pl.CostEstimate(
        flops=int(4 * rows * dim),
        transcendentals=int(rows),
        bytes_accessed=int(rows * dim * (x.dtype.itemsize + out_itemsize)
                           + dim * weight.dtype.itemsize),
    )

    # TODO(synk): for dim < 128 (or not a multiple of 128) a lane-dense output
    # layout (folding several rows into the lane axis per block, with a
    # per-segment in-kernel reduce) would avoid masked vst.msk stores; real T5
    # d_model is already a multiple of 128 so the plain layout is the main path.
    out2d = pl.pallas_call(
        kernel,
        out_shape=jax.ShapeDtypeStruct((rows, dim), out_dtype),
        grid_spec=pltpu.PrefetchScalarGridSpec(
            num_scalar_prefetch=0,
            grid=grid,
            in_specs=[
                pl.BlockSpec((row_tile, dim), lambda i: (i, 0),
                             **x_spec_kwargs),
                pl.BlockSpec((1, dim), lambda i: (0, 0)),
            ],
            out_specs=pl.BlockSpec((row_tile, dim), lambda i: (i, 0)),
        ),
        compiler_params=pltpu.CompilerParams(
            dimension_semantics=("parallel",),
            vmem_limit_bytes=vmem_limit,
        ),
        cost_estimate=cost,
    )(x2d, w2d)

    return out2d.reshape(orig_shape)


def t5_layer_norm_ref(x, weight, eps=1e-6):
    """Pure-JAX reference mirroring the PyTorch forward."""
    x_f32 = x.astype(jnp.float32)
    inv = jax.lax.rsqrt(jnp.mean(x_f32 * x_f32, axis=-1, keepdims=True) + eps)
    y = x_f32 * inv
    if weight.dtype in (jnp.float16, jnp.bfloat16):
        y = y.astype(weight.dtype)
    return weight * y


if __name__ == "__main__":
    key = jax.random.PRNGKey(0)
    kx, kw, kx2, kx3 = jax.random.split(key, 4)

    # --- main case: f32 activations, non-trivial f32 weight ---
    batch, seq, dim = 2, 8, 32
    x = jax.random.normal(kx, (batch, seq, dim), dtype=jnp.float32)
    weight = 1.0 + 0.1 * jax.random.normal(kw, (dim,), dtype=jnp.float32)

    out = jax.block_until_ready(t5_layer_norm(x, weight, eps=1e-6))
    ref = t5_layer_norm_ref(x, weight, eps=1e-6)
    assert out.shape == ref.shape and out.dtype == ref.dtype
    assert jnp.allclose(out, ref, atol=1e-5, rtol=1e-5)

    # --- bf16 weight + ragged row count (15 rows): exercises the
    #     cast-to-weight-dtype path and the full-array single-block path ---
    xb = jax.random.normal(kx2, (3, 5, dim), dtype=jnp.bfloat16)
    wb = jnp.ones((dim,), dtype=jnp.bfloat16)
    outb = jax.block_until_ready(t5_layer_norm(xb, wb, eps=1e-6))
    refb = t5_layer_norm_ref(xb, wb, eps=1e-6)
    assert outb.shape == refb.shape and outb.dtype == refb.dtype
    assert jnp.allclose(outb.astype(jnp.float32), refb.astype(jnp.float32),
                        atol=2e-2, rtol=2e-2)

    # --- ragged rows with a forced small tile: exercises the cdiv grid with a
    #     masked partial last block (no wrapper pad / slice) ---
    xc = jax.random.normal(kx3, (3, 5, dim), dtype=jnp.float32)
    wc = jnp.ones((dim,), dtype=jnp.float32)
    outc = jax.block_until_ready(t5_layer_norm(xc, wc, eps=1e-6,
                                               target_row_tile=8))
    refc = t5_layer_norm_ref(xc, wc, eps=1e-6)
    assert outc.shape == refc.shape and outc.dtype == refc.dtype
    assert jnp.allclose(outc, refc, atol=1e-5, rtol=1e-5)

    print("KERNEL_OK")
</pallas_src>

<mosaic_0001>
module attributes {stable_mosaic.version = 11 : i64} {
  func.func @_t5_layernorm_kernel(%arg0: i32, %arg1: memref<16x32xf32, #tpu.memory_space<vmem>>, %arg2: memref<1x32xf32, #tpu.memory_space<vmem>>, %arg3: memref<16x32xf32, #tpu.memory_space<vmem>>) attributes {dimension_semantics = [#tpu.dimension_semantics<parallel>], iteration_bounds = array<i64: 1>, scalar_prefetch = 0 : i64, scratch_operands = 0 : i64, tpu.core_type = #tpu.core_type<tc>, window_params = [{transform_indices = @transform_0, window_bounds = array<i64: 16, 32>}, {pipeline_mode = #tpu.pipeline_mode<synchronous>, transform_indices = @transform_1, window_bounds = array<i64: 1, 32>}, {transform_indices = @transform_2, window_bounds = array<i64: 16, 32>}]} {
    %c0 = arith.constant 0 : index
    %c0_0 = arith.constant 0 : index
    %0 = vector.load %arg1[%c0, %c0_0] : memref<16x32xf32, #tpu.memory_space<vmem>>, vector<16x32xf32>
    %1 = arith.mulf %0, %0 : vector<16x32xf32>
    %cst = arith.constant dense<0.000000e+00> : vector<16xf32>
    %2 = vector.multi_reduction <add>, %1, %cst [1] : vector<16x32xf32> to vector<16xf32>
    %3 = vector.shape_cast %2 : vector<16xf32> to vector<16x1xf32>
    %cst_1 = arith.constant 3.200000e+01 : f32
    %4 = vector.broadcast %cst_1 : f32 to vector<16x1xf32>
    %5 = arith.divf %3, %4 : vector<16x1xf32>
    %cst_2 = arith.constant 9.99999997E-7 : f32
    %6 = vector.broadcast %cst_2 : f32 to vector<16x1xf32>
    %7 = arith.addf %5, %6 : vector<16x1xf32>
    %8 = math.rsqrt %7 : vector<16x1xf32>
    %9 = vector.broadcast %8 : vector<16x1xf32> to vector<16x32xf32>
    %10 = arith.mulf %0, %9 : vector<16x32xf32>
    %c0_3 = arith.constant 0 : index
    %c0_4 = arith.constant 0 : index
    %11 = vector.load %arg2[%c0_3, %c0_4] : memref<1x32xf32, #tpu.memory_space<vmem>>, vector<1x32xf32>
    %12 = vector.broadcast %11 : vector<1x32xf32> to vector<16x32xf32>
    %13 = arith.mulf %12, %10 : vector<16x32xf32>
    %c0_5 = arith.constant 0 : index
    %c0_6 = arith.constant 0 : index
    %14 = vector.load %arg3[%c0_5, %c0_6] : memref<16x32xf32, #tpu.memory_space<vmem>>, vector<16x32xf32>
    tpu.vector_store %arg3[%c0_5, %c0_6], %13 {strides = array<i32>} : memref<16x32xf32, #tpu.memory_space<vmem>>, vector<16x32xf32>,
    return
  }
  func.func @transform_0(%arg0: i32) -> (i32, i32) {
    %c0_i32 = arith.constant 0 : i32
    %c0_i32_0 = arith.constant 0 : i32
    return %arg0, %c0_i32 : i32, i32
  }
  func.func @transform_1(%arg0: i32) -> (i32, i32) {
    %c0_i32 = arith.constant 0 : i32
    %c0_i32_0 = arith.constant 0 : i32
    %c0_i32_1 = arith.constant 0 : i32
    return %c0_i32, %c0_i32_0 : i32, i32
  }
  func.func @transform_2(%arg0: i32) -> (i32, i32) {
    %c0_i32 = arith.constant 0 : i32
    %c0_i32_0 = arith.constant 0 : i32
    return %arg0, %c0_i32 : i32, i32
  }
}

</mosaic_0001>

<llo_original>
// kernel: tpu_custom_call.1
$region0: #{tpu_custom_call.1}
  #allocation0 [shape = 'u32[]', space=smem, size = 0x4, offset = 0x4, fixed_abs, tag = 'smem constant byte address 0x4 - core index']
  #allocation1 [shape = 'u32[72,128]{1,0:T(1,128)}', space=vmem, size = 0x9000, scoped, tag = 'internal scratch']
  %s0 = inlined_call_operand.hbm [shape: f32[16,32], index: 0, kind: input, shape index: {}]
  %s1 = inlined_call_operand.hbm [shape: f32[1,32], index: 1, kind: input, shape index: {}]
  %s2 = inlined_call_operand.hbm [shape: f32[16,32], index: 2, kind: output, shape index: {}]
  %s3 = sld [smem:[#allocation0]]
  $region26: #{tpu_custom_call.1} parent=0
    _
  %s5 = ssub.s32 1, %s3
  %s6 = scalar_select 0, %s5, %s3
  $region1: #{tpu_custom_call.1} parent=0
    #allocation2 [shape = 'u8[8192]{0}', space=vmem, size = 0x2000, scoped, tag = 'input window, operand 0, single buffered']
    #allocation3 [shape = 's32[1]{0}', space=sflag, size = 0x4, scoped, tag = 'scoped memory for tpu_custom_call.1']
    #allocation4 [shape = 's32[1]{0}', space=sflag, size = 0x4, scoped, tag = 'scoped memory for tpu_custom_call.1']
    #allocation5 [shape = 'u8[512]{0}', space=vmem, size = 0x400, scoped, tag = 'input window, operand 1, single buffered']
    #allocation6 [shape = 's32[1]{0}', space=sflag, size = 0x4, scoped, tag = 'scoped memory for tpu_custom_call.1']
    #allocation7 [shape = 'u8[8192]{0}', space=vmem, size = 0x2000, scoped, tag = 'output window, operand 0, single buffered']
    %7 = vsyncpa [#allocation3], 0
    %8 = vsyncpa [#allocation6], 0
    %9 = vsyncpa [#allocation4], 0
    // Predicated region
    $region2: #{tpu_custom_call.1} parent=1 // pred_check
      _
    $region3: #{tpu_custom_call.1} parent=1 // pred_check_branch
      %11 = sbr.rel (0) target = $region5
    $region4: #{tpu_custom_call.1} parent=1 // pred_region
      %13 = vsyncadd [#allocation3], 0
      %s14 = sshll.u32 %s0, 4
      %s15 = int_to_ptr.hbm [resolvable:$true] %s14
      %s16 = sshll.u32 [#allocation2], 4
      %s17 = int_to_ptr.vmem [resolvable:$true] %s16
      %22 = dma.hbm_to_vmem [thread:$0]  %s15, 256, %s17, [#allocation3], 128, 128, 8
    $region5: #{tpu_custom_call.1} parent=1 // pred_fallthru
      _
    // Predicated region
    $region6: #{tpu_custom_call.1} parent=1 // pred_check
      _
    $region7: #{tpu_custom_call.1} parent=1 // pred_check_branch
      %24 = sbr.rel (0) target = $region9
    $region8: #{tpu_custom_call.1} parent=1 // pred_region
      %26 = vsyncadd [#allocation6], 0
      %s28 = sshll.u32 %s1, 4
      %s29 = int_to_ptr.hbm [resolvable:$true] %s28
      %s30 = sshll.u32 [#allocation5], 4
      %s31 = int_to_ptr.vmem [resolvable:$true] %s30
      %33 = dma.hbm_to_vmem [thread:$0]  %s29, 16, %s31, [#allocation6]
    $region9: #{tpu_custom_call.1} parent=1 // pred_fallthru
      _
    // Predicated region
    $region10: #{tpu_custom_call.1} parent=1 // pred_check
      _
    $region11: #{tpu_custom_call.1} parent=1 // pred_check_branch
      %35 = sbr.rel (0) target = $region13
    $region12: #{tpu_custom_call.1} parent=1 // pred_region
      %37 = dma.done [#allocation3], 256
    $region13: #{tpu_custom_call.1} parent=1 // pred_fallthru
      _
    // Predicated region
    $region14: #{tpu_custom_call.1} parent=1 // pred_check
      _
    $region15: #{tpu_custom_call.1} parent=1 // pred_check_branch
      %39 = sbr.rel (0) target = $region17
    $region16: #{tpu_custom_call.1} parent=1 // pred_region
      %41 = dma.done [#allocation6], 16
    $region17: #{tpu_custom_call.1} parent=1 // pred_fallthru
      _
    %v42 = vld [vmem:[#allocation2] sm:$0xff]
    %v43 = vld [vmem:[#allocation2 + $0x8] sm:$0xff]
    %v44 = vmul.f32 %v42, %v42
    %v45 = vmul.f32 %v43, %v43
    %vm46 = vcmask 261120
    %v47 = vsel %vm46, %v44, 0.0
    %48 = vadd.xlane.f32.xlu0 %v47
    %v49 = vpop.xlane.xlu0 %48
    %v50 = vsel %vm46, %v45, 0.0
    %51 = vadd.xlane.f32.xlu0 %v50
    %v52 = vpop.xlane.xlu0 %51
    %v53 = vrcp.pop 32.0
    %v54 = vmul.f32 32.0, %v53
    %v55 = vsub.f32 1.0, %v54
    %v56 = vmul.f32 %v53, %v55
    %v57 = vadd.f32 %v53, %v56
    %vm58 = vweird.f32 %v53
    %v59 = vsel %vm58, %v53, %v57
    %v60 = vmul.f32 %v49, %v59
    %v61 = vmul.f32 %v52, %v59
    %v62 = vadd.f32 %v60, 1e-06
    %v63 = vadd.f32 %v61, 1e-06
    %v64 = vrsqrt.pop %v62
    %v65 = vmul.f32 %v64, %v62
    %v66 = vmul.f32 %v65, %v64
    %v67 = vmul.f32 0.5, %v66
    %v68 = vsub.f32 1.5, %v67
    %v69 = vmul.f32 %v64, %v68
    %vm70 = vweird.f32 %v62
    %vm71 = vweird.f32 %v64
    %vm72 = vmor %vm70, %vm71
    %v73 = vsel %vm72, %v64, %v69
    %v74 = vrsqrt.pop %v63
    %v75 = vmul.f32 %v74, %v63
    %v76 = vmul.f32 %v75, %v74
    %v77 = vmul.f32 0.5, %v76
    %v78 = vsub.f32 1.5, %v77
    %v79 = vmul.f32 %v74, %v78
    %vm80 = vweird.f32 %v63
    %vm81 = vweird.f32 %v74
    %vm82 = vmor %vm80, %vm81
    %v83 = vsel %vm82, %v74, %v79
    %v84 = vmul.f32 %v42, %v73
    %v85 = vmul.f32 %v43, %v83
    %v86 = vld [vmem:[#allocation5] sm:$0x1]
    %v88 = vperm.slane %v86, 0
    %v90 = vmul.f32 %v88, %v84
    %v91 = vmul.f32 %v88, %v85
    %92 = vst.msk [vmem:[#allocation7] sm:$0xff] %vm46, %v90
    %93 = vst.msk [vmem:[#allocation7 + $0x8] sm:$0xff] %vm46, %v91
    // Predicated region
    $region18: #{tpu_custom_call.1} parent=1 // pred_check
      _
    $region19: #{tpu_custom_call.1} parent=1 // pred_check_branch
      %95 = sbr.rel (0) target = $region21
    $region20: #{tpu_custom_call.1} parent=1 // pred_region
      %97 = vsyncadd [#allocation4], 0
      %s98 = sshll.u32 [#allocation7], 4
      %s99 = int_to_ptr.vmem [resolvable:$true] %s98
      %s100 = sshll.u32 %s2, 4
      %s101 = int_to_ptr.hbm [resolvable:$true] %s100
      %106 = dma.vmem_to_hbm [thread:$0]  %s99, 256, %s101, [#allocation4], 128, 128, 8
    $region21: #{tpu_custom_call.1} parent=1 // pred_fallthru
      _
    // Predicated region
    $region22: #{tpu_custom_call.1} parent=1 // pred_check
      _
    $region23: #{tpu_custom_call.1} parent=1 // pred_check_branch
      %108 = sbr.rel (0) target = $region25
    $region24: #{tpu_custom_call.1} parent=1 // pred_region
      %110 = dma.done [#allocation4], 256
    $region25: #{tpu_custom_call.1} parent=1 // pred_fallthru
      _
    %111 = vsyncpa [#allocation3], 1
    %112 = vsyncpa [#allocation6], 1
    %113 = vsyncpa [#allocation4], 1

</llo_original>
